<compile_context>
chip_gen: v6e
topology: v6e:2x2x1
jax: 0.10.0
libtpu: 0.0.40
codegen_flags: <defaults>
</compile_context>

<pallas_src>
import functools

import numpy as np

import jax
import jax.numpy as jnp
from jax.experimental import pallas as pl
from jax.experimental.pallas import tpu as pltpu

_LANES = 128


def _metrics_kernel(hist_ref, out_ref):
    R, E = hist_ref.shape          # R = padded row count (multiple of 8)
    LANES = out_ref.shape[1]       # 128: lane-dense output slab

    h = hist_ref[...]                                        # (R, E) f32

    # Uniform per-row reductions (one vreg of work; see header comment).
    row_sum = jnp.sum(h, axis=1, keepdims=True)              # (R, 1)
    row_last = h[:, E - 1:E]                                 # (R, 1)
    row_max = jnp.max(h, axis=1, keepdims=True)              # (R, 1)

    # First-occurrence argmax over epochs (matches torch.argmax tie behavior).
    idx = jax.lax.broadcasted_iota(jnp.int32, (R, E), 1)
    row_arg = jnp.min(jnp.where(h == row_max, idx, jnp.int32(E)),
                      axis=1, keepdims=True)                 # (R, 1) int32

    # Per-row select: row0 -> sum(times), rows1/2 -> last loss, rows>=3 -> max.
    rowi = jax.lax.broadcasted_iota(jnp.int32, (R, 1), 0)
    lane0_val = jnp.where(rowi == 0, row_sum,
                          jnp.where(rowi < 3, row_last, row_max))   # (R, 1)
    # Exact transport of the int32 epoch index through the f32 slab.
    lane1_val = pltpu.bitcast(row_arg, jnp.float32)                 # (R, 1)

    # Assemble the full lane-dense slab; single unmasked full-block store.
    lane = jax.lax.broadcasted_iota(jnp.int32, (R, LANES), 1)
    slab = jnp.where(lane == 0, lane0_val,
                     jnp.where(lane == 1, lane1_val, jnp.float32(0.0)))
    out_ref[...] = slab


def round_up_rows(num_metrics):
    """Padded row count for a history buffer with `num_metrics` tracked metrics."""
    r_live = 3 + num_metrics
    return -(-r_live // 8) * 8


@functools.partial(jax.jit, static_argnames=())
def metrics_summary_slab(history):
    """history: pre-stacked (R_pad, E) f32 buffer owned by the caller.

    Rows: 0=times, 1=loss_train, 2=loss_val, 3..3+M-1=metrics, rest=zero pad.
    Returns the raw (R_pad, 128) f32 summary slab (unpack host-side)."""
    R_pad, E = history.shape
    assert R_pad % 8 == 0, "history rows must be padded to a multiple of 8"

    cost = pl.CostEstimate(
        flops=4 * R_pad * E,                      # sum + max + cmp + min passes
        transcendentals=0,
        bytes_accessed=4 * R_pad * E + 4 * R_pad * _LANES,
    )
    return pl.pallas_call(
        _metrics_kernel,
        out_shape=jax.ShapeDtypeStruct((R_pad, _LANES), jnp.float32),
        cost_estimate=cost,
    )(history)


def unpack_summary(slab, num_metrics):
    """Host-side split of the slab (keeps slice HLOs off the device path)."""
    s = np.asarray(jax.device_get(slab))
    total_time = float(s[0, 0])
    last_losses = s[1:3, 0].copy()                          # [train, val]
    best_val = s[3:3 + num_metrics, 0].copy()
    best_epoch = np.ascontiguousarray(
        s[3:3 + num_metrics, 1]).view(np.int32).copy()
    return total_time, last_losses, best_val, best_epoch


if __name__ == "__main__":
    # Deterministic synthetic training history: E epochs, M tracked metrics
    # (e.g. 'F1 Score', 'Accuracy', 'Precision', 'Recall').
    E, M = 8, 4
    R_pad = round_up_rows(M)

    key = jax.random.PRNGKey(0)
    k_t, k_lt, k_lv, k_m = jax.random.split(key, 4)

    times = np.asarray(10.0 + 5.0 * jax.random.uniform(k_t, (E,)), np.float32)
    loss_train = (1.0 / np.arange(1, E + 1, dtype=np.float32)
                  + 0.01 * np.asarray(jax.random.uniform(k_lt, (E,)), np.float32))
    loss_val = (1.2 / np.arange(1, E + 1, dtype=np.float32)
                + 0.01 * np.asarray(jax.random.uniform(k_lv, (E,)), np.float32))
    metrics_np = np.asarray(jax.random.uniform(k_m, (M, E)), np.float32)

    # The caller-owned pre-stacked history buffer (appended to once per epoch
    # in a real training loop).  Built host-side: no device concat HLO.
    history_np = np.zeros((R_pad, E), np.float32)
    history_np[0] = times
    history_np[1] = loss_train
    history_np[2] = loss_val
    history_np[3:3 + M] = metrics_np
    history = jnp.asarray(history_np)

    slab = jax.block_until_ready(metrics_summary_slab(history))
    total_time, last_losses, best_val, best_epoch = unpack_summary(slab, M)

    # Pure-numpy reference (mirrors Metrics.forward / Metrics.get_best).
    ref_total = float(times.sum())
    ref_last = np.array([loss_train[-1], loss_val[-1]], np.float32)
    ref_best = metrics_np.max(axis=1)
    ref_arg = metrics_np.argmax(axis=1).astype(np.int32)

    assert np.allclose(total_time, ref_total, rtol=1e-6)
    assert np.allclose(last_losses, ref_last, rtol=1e-6)
    assert np.allclose(best_val, ref_best, rtol=1e-6)
    assert np.array_equal(best_epoch, ref_arg)

    # TODO(synk): matplotlib plotting, seconds_to_string formatting and the
    # print() calls in Metrics.forward()/print()/get_best() are host-side I/O
    # with no Pallas equivalent.
    print("KERNEL_OK")
</pallas_src>

<mosaic_0001>
module attributes {stable_mosaic.version = 11 : i64} {
  func.func @_metrics_kernel(%arg0: memref<8x8xf32, #tpu.memory_space<vmem>>, %arg1: memref<8x128xf32, #tpu.memory_space<vmem>>) attributes {dimension_semantics = [], scalar_prefetch = 0 : i64, scratch_operands = 0 : i64, tpu.core_type = #tpu.core_type<tc>} {
    %c0 = arith.constant 0 : index
    %c0_0 = arith.constant 0 : index
    %0 = vector.load %arg0[%c0, %c0_0] : memref<8x8xf32, #tpu.memory_space<vmem>>, vector<8x8xf32>
    %cst = arith.constant dense<0.000000e+00> : vector<8xf32>
    %1 = vector.multi_reduction <add>, %0, %cst [1] : vector<8x8xf32> to vector<8xf32>
    %2 = vector.shape_cast %1 : vector<8xf32> to vector<8x1xf32>
    %3 = vector.extract_strided_slice %0 {offsets = [0, 7], sizes = [8, 1], strides = [1, 1]} : vector<8x8xf32> to vector<8x1xf32>
    %cst_1 = arith.constant dense<0xFF800000> : vector<8xf32>
    %4 = vector.multi_reduction <maximumf>, %0, %cst_1 [1] : vector<8x8xf32> to vector<8xf32>
    %5 = vector.shape_cast %4 : vector<8xf32> to vector<8x1xf32>
    %6 = tpu.iota {dimensions = array<i32: 1>} : vector<8x8xi32>
    %7 = vector.broadcast %5 : vector<8x1xf32> to vector<8x8xf32>
    %8 = arith.cmpf oeq, %0, %7 : vector<8x8xf32>
    %c8_i32 = arith.constant 8 : i32
    %9 = vector.broadcast %c8_i32 : i32 to vector<8x8xi32>
    %10 = arith.select %8, %6, %9 : vector<8x8xi1>, vector<8x8xi32>
    %cst_2 = arith.constant dense<2147483647> : vector<8xi32>
    %11 = vector.multi_reduction <minsi>, %10, %cst_2 [1] : vector<8x8xi32> to vector<8xi32>
    %12 = vector.shape_cast %11 : vector<8xi32> to vector<8x1xi32>
    %13 = tpu.iota {dimensions = array<i32: 0>} : vector<8x1xi32>
    %c0_i32 = arith.constant 0 : i32
    %14 = vector.broadcast %c0_i32 : i32 to vector<8x1xi32>
    %15 = arith.cmpi eq, %13, %14 : vector<8x1xi32>
    %c3_i32 = arith.constant 3 : i32
    %16 = vector.broadcast %c3_i32 : i32 to vector<8x1xi32>
    %17 = arith.cmpi slt, %13, %16 : vector<8x1xi32>
    %18 = arith.select %17, %3, %5 : vector<8x1xi1>, vector<8x1xf32>
    %19 = arith.select %15, %2, %18 : vector<8x1xi1>, vector<8x1xf32>
    %20 = tpu.bitcast %12 : vector<8x1xi32> -> vector<8x1xf32>
    %21 = tpu.iota {dimensions = array<i32: 1>} : vector<8x128xi32>
    %c0_i32_3 = arith.constant 0 : i32
    %22 = vector.broadcast %c0_i32_3 : i32 to vector<8x128xi32>
    %23 = arith.cmpi eq, %21, %22 : vector<8x128xi32>
    %c1_i32 = arith.constant 1 : i32
    %24 = vector.broadcast %c1_i32 : i32 to vector<8x128xi32>
    %25 = arith.cmpi eq, %21, %24 : vector<8x128xi32>
    %cst_4 = arith.constant 0.000000e+00 : f32
    %26 = vector.shape_cast %20 : vector<8x1xf32> to vector<8x1xf32>
    %27 = vector.broadcast %26 : vector<8x1xf32> to vector<8x128xf32>
    %28 = vector.broadcast %cst_4 : f32 to vector<8x128xf32>
    %29 = arith.select %25, %27, %28 : vector<8x128xi1>, vector<8x128xf32>
    %30 = vector.shape_cast %19 : vector<8x1xf32> to vector<8x1xf32>
    %31 = vector.broadcast %30 : vector<8x1xf32> to vector<8x128xf32>
    %32 = arith.select %23, %31, %29 : vector<8x128xi1>, vector<8x128xf32>
    %c0_5 = arith.constant 0 : index
    %c0_6 = arith.constant 0 : index
    %33 = vector.load %arg1[%c0_5, %c0_6] : memref<8x128xf32, #tpu.memory_space<vmem>>, vector<8x128xf32>
    tpu.vector_store %arg1[%c0_5, %c0_6], %32 {strides = array<i32>} : memref<8x128xf32, #tpu.memory_space<vmem>>, vector<8x128xf32>,
    return
  }
}

</mosaic_0001>

<llo_original>
// kernel: metrics_summary_slab.1
$region0: #{metrics_summary_slab.1}
  #allocation0 [shape = 'u32[]', space=smem, size = 0x4, offset = 0x4, fixed_abs, tag = 'smem constant byte address 0x4 - core index']
  #allocation1 [shape = 'u32[144,128]{1,0:T(1,128)}', space=vmem, size = 0x12000, scoped, tag = 'internal scratch']
  %s0 = inlined_call_operand.hbm [shape: f32[8,8], index: 0, kind: input, shape index: {}]
  %s1 = inlined_call_operand.hbm [shape: f32[8,128], index: 1, kind: output, shape index: {}]
  %s2 = sld [smem:[#allocation0]]
  $region18: #{metrics_summary_slab.1} parent=0
    _
  %s4 = ssub.s32 1, %s2
  %s5 = scalar_select 0, %s4, %s2
  $region1: #{metrics_summary_slab.1} parent=0
    #allocation2 [shape = 'u8[4096]{0}', space=vmem, size = 0x1000, scoped, tag = 'input window, operand 0, single buffered']
    #allocation3 [shape = 's32[1]{0}', space=sflag, size = 0x4, scoped, tag = 'scoped memory for metrics_summary_slab.1']
    #allocation4 [shape = 's32[1]{0}', space=sflag, size = 0x4, scoped, tag = 'scoped memory for metrics_summary_slab.1']
    #allocation5 [shape = 'u8[4096]{0}', space=vmem, size = 0x1000, scoped, tag = 'output window, operand 0, single buffered']
    %6 = vsyncpa [#allocation3], 0
    %7 = vsyncpa [#allocation4], 0
    // Predicated region
    $region2: #{metrics_summary_slab.1} parent=1 // pred_check
      _
    $region3: #{metrics_summary_slab.1} parent=1 // pred_check_branch
      %9 = sbr.rel (0) target = $region5
    $region4: #{metrics_summary_slab.1} parent=1 // pred_region
      %s11 = ssub.s32 128, 128
      %12 = vsyncadd [#allocation3], %s11
      %s14 = sshll.u32 [#allocation2], 4
      %s15 = int_to_ptr.vmem [resolvable:$true] %s14
      %17 = dma.hbm_to_vmem [thread:$0]  %s0, 128, %s15, [#allocation3]
    $region5: #{metrics_summary_slab.1} parent=1 // pred_fallthru
      _
    // Predicated region
    $region6: #{metrics_summary_slab.1} parent=1 // pred_check
      _
    $region7: #{metrics_summary_slab.1} parent=1 // pred_check_branch
      %19 = sbr.rel (0) target = $region9
    $region8: #{metrics_summary_slab.1} parent=1 // pred_region
      %20 = dma.done [#allocation3], 128
    $region9: #{metrics_summary_slab.1} parent=1 // pred_fallthru
      _
    %v21 = vld [vmem:[#allocation2] sm:$0xff]
    %vm22 = vcmask 64512
    %v23 = vsel %vm22, %v21, 0.0
    %24 = vadd.xlane.f32.xlu0 %v23
    %v25 = vpop.xlane.xlu0 %24
    %v26 = vsel %vm22, %v21, -inf
    %27 = vmax.xlane.f32.xlu0 %v26
    %v28 = vpop.xlane.xlu0 %27
    %v29 = vlaneseq
    %v30 = vand.u32 %v29, 127
    %vm31 = vcmp.eq.f32.partialorder %v21, %v28
    %v32 = vsel %vm31, %v30, 8
    %v33 = vsel %vm22, %v32, 2147483647
    %v34 = vand.u32 %v33, 65535
    %v35 = vshra.s32 %v33, 16
    %v36 = vcvt.s32.f32 %v34
    %v37 = vcvt.s32.f32 %v35
    %38 = vmin.xlane.f32.xlu0 %v37
    %v39 = vpop.xlane.xlu0 %38
    %vm40 = vcmp.eq.f32.partialorder %v37, %v39
    %v41 = vsel %vm40, %v36, inf
    %42 = vmin.xlane.f32.xlu0 %v41
    %v43 = vpop.xlane.xlu0 %42
    %v44 = vcvt.f32.s32 %v43
    %v45 = vcvt.f32.s32 %v39
    %v46 = vshll.u32 %v45, 16
    %v47 = vadd.s32 %v46, %v44
    %v48 = vlaneseq
    %v49 = vshrl.u32 %v48, 7
    %vm50 = vcmp.eq.s32.totalorder %v49, 0
    %vm51 = vcmp.lt.s32.totalorder %v49, 3
    %v52 = vsel %vm51, %v21, %v28
    %v53 = vsel %vm50, %v25, %v52
    %vm55 = vcmp.eq.s32.totalorder %v30, 0
    %vm56 = vcmp.eq.s32.totalorder %v30, 1
    %v57 = vsel %vm56, %v47, 0.0
    %59 = vset.pattern.permute.xlu0 7
    %60 = vperm.xlu0 %59, %v53
    %v61 = vpop.permute.xlu0 %60
    %v63 = vsel %vm55, %v61, %v57
    %64 = vst [vmem:[#allocation5] sm:$0xff] %v63
    // Predicated region
    $region10: #{metrics_summary_slab.1} parent=1 // pred_check
      _
    $region11: #{metrics_summary_slab.1} parent=1 // pred_check_branch
      %66 = sbr.rel (0) target = $region13
    $region12: #{metrics_summary_slab.1} parent=1 // pred_region
      %s68 = ssub.s32 128, 128
      %69 = vsyncadd [#allocation4], %s68
      %s71 = sshll.u32 [#allocation5], 4
      %s72 = int_to_ptr.vmem [resolvable:$true] %s71
      %74 = dma.vmem_to_hbm [thread:$0]  %s72, 128, %s1, [#allocation4]
    $region13: #{metrics_summary_slab.1} parent=1 // pred_fallthru
      _
    // Predicated region
    $region14: #{metrics_summary_slab.1} parent=1 // pred_check
      _
    $region15: #{metrics_summary_slab.1} parent=1 // pred_check_branch
      %76 = sbr.rel (0) target = $region17
    $region16: #{metrics_summary_slab.1} parent=1 // pred_region
      %77 = dma.done [#allocation4], 128
    $region17: #{metrics_summary_slab.1} parent=1 // pred_fallthru
      _
    %78 = vsyncpa [#allocation3], 1
    %79 = vsyncpa [#allocation4], 1

</llo_original>
